<compile_context>
chip_gen: v6e
topology: v6e:2x2x1
jax: 0.10.0
libtpu: 0.0.40
codegen_flags: <defaults>
</compile_context>

<pallas_src>
import math

import jax
import jax.numpy as jnp
from jax.experimental import pallas as pl
from jax.experimental.pallas import tpu as pltpu


def _round_up(v: int, m: int) -> int:
    return (v + m - 1) // m * m


def _mlp_kernel(x_ref, *refs):
    """refs = (w0, b0, ..., w_{L-1}, b_{L-1}, w_final, b_final, out_ref)."""
    *param_refs, out_ref = refs
    n_hidden = (len(param_refs) - 2) // 2

    # x streamed in native f32; cast to bf16 on-chip (VPU) for the MXU operands.
    h = x_ref[...].astype(jnp.bfloat16)                 # (TB, d) bf16
    for i in range(n_hidden):
        w = param_refs[2 * i][...]                      # (in, out) bf16, resident
        b = param_refs[2 * i + 1][...]                  # (1, out)  f32,  resident
        a = jnp.dot(h, w, preferred_element_type=jnp.float32) + b   # f32 acc + bias
        h = jnp.maximum(a, 0.0).astype(jnp.bfloat16)    # ReLU in f32, bf16 for next MXU pass

    wf = param_refs[-2][...]                            # (1, hidden) bf16
    bf = param_refs[-1][0, 0]                           # scalar f32 from SMEM
    # Final Linear(hidden -> 1): contract the feature axis of both operands
    # (wf @ h^T).  M=1, N=TB -> lane-dense (1, TB) result, no masked (TB, 1) stores.
    y = jax.lax.dot_general(
        wf, h, (((1,), (1,)), ((), ())), preferred_element_type=jnp.float32
    )                                                   # (1, TB) f32
    out_ref[...] = y + bf                               # broadcast scalar bias


def deep_nn_forward(x, params, *, block_b: int = 1024):
    """x: (B, d) f32; params: flat list [w0, b0, ..., wf, bf] (see init_params).
    Returns shape (B,) for B > 1, a 0-d scalar for B == 1 (torch .squeeze() semantics)."""
    B, d = x.shape

    # Lane-dense output tiles: TB is always a multiple of 128.  Cap TB at
    # ceil(B/2) (rounded to 128) so there are >= 2 grid steps whenever B allows,
    # which lets the "parallel" batch axis use both TensorCores on v7x.
    block_b = max(128, _round_up(block_b, 128))
    half_b = _round_up(-(-B // 2), 128)
    TB = min(block_b, max(128, half_b))
    grid = (pl.cdiv(B, TB),)                            # no padding: tail rows are
                                                        # row-independent garbage and the
                                                        # tail output columns are masked.

    in_specs = [pl.BlockSpec((TB, d), lambda i: (i, 0))]            # x: streamed per tile
    # Weights / biases: full blocks with constant index_map -> fetched once, resident.
    in_specs += [pl.BlockSpec(p.shape, lambda i: (0, 0)) for p in params[:-1]]
    # Scalar final bias lives in SMEM (no dedicated (1,1) VMEM block / DMA buffering).
    in_specs += [pl.BlockSpec(memory_space=pltpu.MemorySpace.SMEM)]

    out = pl.pallas_call(
        _mlp_kernel,
        out_shape=jax.ShapeDtypeStruct((1, B), jnp.float32),
        grid=grid,
        in_specs=in_specs,
        out_specs=pl.BlockSpec((1, TB), lambda i: (0, i)),
        compiler_params=pltpu.CompilerParams(
            dimension_semantics=("parallel",),          # independent batch tiles (megacore)
            vmem_limit_bytes=48 * 1024 * 1024,          # > default scoped limit on all gens,
                                                        # < v7x's 64 MiB physical VMEM
        ),
    )(x, *params)

    y = out[0]
    return y[0] if B == 1 else y                        # match torch .squeeze()


def init_params(key, d, hidden_size, depth):
    """Mirror of the PyTorch module's __init__ (hidden weights transposed to (in, out))."""
    params = []
    prev_dim = d
    gain = math.sqrt(2.0)                               # nn.init.calculate_gain('relu')
    for _ in range(depth):
        key, wk = jax.random.split(key)
        std = gain / math.sqrt(prev_dim)
        w = std * jax.random.normal(wk, (prev_dim, hidden_size), dtype=jnp.float32)
        params.append(w.astype(jnp.bfloat16))           # MXU operand dtype
        params.append(jnp.zeros((1, hidden_size), dtype=jnp.float32))
        prev_dim = hidden_size
    key, wk = jax.random.split(key)
    wf = 0.01 * jax.random.normal(wk, (1, prev_dim), dtype=jnp.float32)  # same layout as torch
    params.append(wf.astype(jnp.bfloat16))
    params.append(jnp.zeros((1, 1), dtype=jnp.float32))
    return params


def _reference_forward(x, params):
    """Plain-JAX reference using identical dtypes/ops as the kernel."""
    n_hidden = (len(params) - 2) // 2
    h = x.astype(jnp.bfloat16)
    for i in range(n_hidden):
        a = jnp.dot(h, params[2 * i], preferred_element_type=jnp.float32) + params[2 * i + 1]
        h = jnp.maximum(a, 0.0).astype(jnp.bfloat16)
    y = jax.lax.dot_general(
        params[-2], h, (((1,), (1,)), ((), ())), preferred_element_type=jnp.float32
    ) + params[-1]
    return y[0]


if __name__ == "__main__":
    d, hidden_size, depth = 16, 32, 3
    batch = 500                                         # not a tile multiple -> ragged tail path

    key = jax.random.PRNGKey(0)
    key, xk = jax.random.split(key)
    x = jax.random.normal(xk, (batch, d), dtype=jnp.float32)
    params = init_params(key, d, hidden_size, depth)

    # block_b=1024, B=500 -> TB=256, 2 lane-dense grid steps (feeds both TCs on v7x).
    y = deep_nn_forward(x, params)
    jax.block_until_ready(y)

    y_ref = _reference_forward(x, params)
    assert y.shape == (batch,), y.shape
    assert jnp.allclose(y, y_ref, atol=1e-3, rtol=1e-3), float(jnp.max(jnp.abs(y - y_ref)))

    print("KERNEL_OK")
</pallas_src>

<mosaic_0001>
module attributes {stable_mosaic.version = 11 : i64} {
  func.func @_mlp_kernel(%arg0: i32, %arg1: memref<256x16xf32, #tpu.memory_space<vmem>>, %arg2: memref<16x32xbf16, #tpu.memory_space<vmem>>, %arg3: memref<1x32xf32, #tpu.memory_space<vmem>>, %arg4: memref<32x32xbf16, #tpu.memory_space<vmem>>, %arg5: memref<1x32xf32, #tpu.memory_space<vmem>>, %arg6: memref<32x32xbf16, #tpu.memory_space<vmem>>, %arg7: memref<1x32xf32, #tpu.memory_space<vmem>>, %arg8: memref<1x32xbf16, #tpu.memory_space<vmem>>, %arg9: memref<1x1xf32, #tpu.memory_space<smem>>, %arg10: memref<1x256xf32, #tpu.memory_space<vmem>>) attributes {dimension_semantics = [#tpu.dimension_semantics<parallel>], iteration_bounds = array<i64: 2>, scalar_prefetch = 0 : i64, scratch_operands = 0 : i64, tpu.core_type = #tpu.core_type<tc>, window_params = [{transform_indices = @transform_0, window_bounds = array<i64: 256, 16>}, {pipeline_mode = #tpu.pipeline_mode<synchronous>, transform_indices = @transform_1, window_bounds = array<i64: 16, 32>}, {pipeline_mode = #tpu.pipeline_mode<synchronous>, transform_indices = @transform_2, window_bounds = array<i64: 1, 32>}, {pipeline_mode = #tpu.pipeline_mode<synchronous>, transform_indices = @transform_3, window_bounds = array<i64: 32, 32>}, {pipeline_mode = #tpu.pipeline_mode<synchronous>, transform_indices = @transform_4, window_bounds = array<i64: 1, 32>}, {pipeline_mode = #tpu.pipeline_mode<synchronous>, transform_indices = @transform_5, window_bounds = array<i64: 32, 32>}, {pipeline_mode = #tpu.pipeline_mode<synchronous>, transform_indices = @transform_6, window_bounds = array<i64: 1, 32>}, {pipeline_mode = #tpu.pipeline_mode<synchronous>, transform_indices = @transform_7, window_bounds = array<i64: 1, 32>}, {transform_indices = @transform_8, window_bounds = array<i64: 1, 1>}, {transform_indices = @transform_9, window_bounds = array<i64: 1, 256>}]} {
    %c0 = arith.constant 0 : index
    %c0_0 = arith.constant 0 : index
    %0 = vector.load %arg1[%c0, %c0_0] : memref<256x16xf32, #tpu.memory_space<vmem>>, vector<256x16xf32>
    %1 = arith.truncf %0 : vector<256x16xf32> to vector<256x16xbf16>
    %c0_1 = arith.constant 0 : index
    %c0_2 = arith.constant 0 : index
    %2 = vector.load %arg2[%c0_1, %c0_2] : memref<16x32xbf16, #tpu.memory_space<vmem>>, vector<16x32xbf16>
    %c0_3 = arith.constant 0 : index
    %c0_4 = arith.constant 0 : index
    %3 = vector.load %arg3[%c0_3, %c0_4] : memref<1x32xf32, #tpu.memory_space<vmem>>, vector<1x32xf32>
    %cst = arith.constant dense<0.000000e+00> : vector<256x32xf32>
    %4 = tpu.matmul %1, %2, %cst {dimension_numbers = #tpu.dot_dimension_numbers<[1], [0], [0], [1], [0, 0, 1, 1], [], []>} : vector<256x16xbf16>, vector<16x32xbf16>, vector<256x32xf32> -> vector<256x32xf32>
    %5 = vector.broadcast %3 : vector<1x32xf32> to vector<256x32xf32>
    %6 = arith.addf %4, %5 : vector<256x32xf32>
    %cst_5 = arith.constant 0.000000e+00 : f32
    %7 = vector.broadcast %cst_5 : f32 to vector<256x32xf32>
    %8 = arith.maximumf %6, %7 : vector<256x32xf32>
    %9 = arith.truncf %8 : vector<256x32xf32> to vector<256x32xbf16>
    %c0_6 = arith.constant 0 : index
    %c0_7 = arith.constant 0 : index
    %10 = vector.load %arg4[%c0_6, %c0_7] : memref<32x32xbf16, #tpu.memory_space<vmem>>, vector<32x32xbf16>
    %c0_8 = arith.constant 0 : index
    %c0_9 = arith.constant 0 : index
    %11 = vector.load %arg5[%c0_8, %c0_9] : memref<1x32xf32, #tpu.memory_space<vmem>>, vector<1x32xf32>
    %cst_10 = arith.constant dense<0.000000e+00> : vector<256x32xf32>
    %12 = tpu.matmul %9, %10, %cst_10 {dimension_numbers = #tpu.dot_dimension_numbers<[1], [0], [0], [1], [0, 0, 1, 1], [], []>} : vector<256x32xbf16>, vector<32x32xbf16>, vector<256x32xf32> -> vector<256x32xf32>
    %13 = vector.broadcast %11 : vector<1x32xf32> to vector<256x32xf32>
    %14 = arith.addf %12, %13 : vector<256x32xf32>
    %cst_11 = arith.constant 0.000000e+00 : f32
    %15 = vector.broadcast %cst_11 : f32 to vector<256x32xf32>
    %16 = arith.maximumf %14, %15 : vector<256x32xf32>
    %17 = arith.truncf %16 : vector<256x32xf32> to vector<256x32xbf16>
    %c0_12 = arith.constant 0 : index
    %c0_13 = arith.constant 0 : index
    %18 = vector.load %arg6[%c0_12, %c0_13] : memref<32x32xbf16, #tpu.memory_space<vmem>>, vector<32x32xbf16>
    %c0_14 = arith.constant 0 : index
    %c0_15 = arith.constant 0 : index
    %19 = vector.load %arg7[%c0_14, %c0_15] : memref<1x32xf32, #tpu.memory_space<vmem>>, vector<1x32xf32>
    %cst_16 = arith.constant dense<0.000000e+00> : vector<256x32xf32>
    %20 = tpu.matmul %17, %18, %cst_16 {dimension_numbers = #tpu.dot_dimension_numbers<[1], [0], [0], [1], [0, 0, 1, 1], [], []>} : vector<256x32xbf16>, vector<32x32xbf16>, vector<256x32xf32> -> vector<256x32xf32>
    %21 = vector.broadcast %19 : vector<1x32xf32> to vector<256x32xf32>
    %22 = arith.addf %20, %21 : vector<256x32xf32>
    %cst_17 = arith.constant 0.000000e+00 : f32
    %23 = vector.broadcast %cst_17 : f32 to vector<256x32xf32>
    %24 = arith.maximumf %22, %23 : vector<256x32xf32>
    %25 = arith.truncf %24 : vector<256x32xf32> to vector<256x32xbf16>
    %c0_18 = arith.constant 0 : index
    %c0_19 = arith.constant 0 : index
    %26 = vector.load %arg8[%c0_18, %c0_19] : memref<1x32xbf16, #tpu.memory_space<vmem>>, vector<1x32xbf16>
    %c0_20 = arith.constant 0 : index
    %c0_21 = arith.constant 0 : index
    %27 = memref.load %arg9[%c0_20, %c0_21] : memref<1x1xf32, #tpu.memory_space<smem>>
    %cst_22 = arith.constant dense<0.000000e+00> : vector<1x256xf32>
    %28 = tpu.matmul %26, %25, %cst_22 {dimension_numbers = #tpu.dot_dimension_numbers<[1], [1], [0], [0], [0, 0, 1, 0], [], []>} : vector<1x32xbf16>, vector<256x32xbf16>, vector<1x256xf32> -> vector<1x256xf32>
    %29 = vector.broadcast %27 : f32 to vector<1x256xf32>
    %30 = arith.addf %28, %29 : vector<1x256xf32>
    %c0_23 = arith.constant 0 : index
    %c0_24 = arith.constant 0 : index
    %31 = vector.load %arg10[%c0_23, %c0_24] : memref<1x256xf32, #tpu.memory_space<vmem>>, vector<1x256xf32>
    tpu.vector_store %arg10[%c0_23, %c0_24], %30 {strides = array<i32>} : memref<1x256xf32, #tpu.memory_space<vmem>>, vector<1x256xf32>,
    return
  }
  func.func @transform_0(%arg0: i32) -> (i32, i32) {
    %c0_i32 = arith.constant 0 : i32
    %c0_i32_0 = arith.constant 0 : i32
    return %arg0, %c0_i32 : i32, i32
  }
  func.func @transform_1(%arg0: i32) -> (i32, i32) {
    %c0_i32 = arith.constant 0 : i32
    %c0_i32_0 = arith.constant 0 : i32
    %c0_i32_1 = arith.constant 0 : i32
    return %c0_i32, %c0_i32_0 : i32, i32
  }
  func.func @transform_2(%arg0: i32) -> (i32, i32) {
    %c0_i32 = arith.constant 0 : i32
    %c0_i32_0 = arith.constant 0 : i32
    %c0_i32_1 = arith.constant 0 : i32
    return %c0_i32, %c0_i32_0 : i32, i32
  }
  func.func @transform_3(%arg0: i32) -> (i32, i32) {
    %c0_i32 = arith.constant 0 : i32
    %c0_i32_0 = arith.constant 0 : i32
    %c0_i32_1 = arith.constant 0 : i32
    return %c0_i32, %c0_i32_0 : i32, i32
  }
  func.func @transform_4(%arg0: i32) -> (i32, i32) {
    %c0_i32 = arith.constant 0 : i32
    %c0_i32_0 = arith.constant 0 : i32
    %c0_i32_1 = arith.constant 0 : i32
    return %c0_i32, %c0_i32_0 : i32, i32
  }
  func.func @transform_5(%arg0: i32) -> (i32, i32) {
    %c0_i32 = arith.constant 0 : i32
    %c0_i32_0 = arith.constant 0 : i32
    %c0_i32_1 = arith.constant 0 : i32
    return %c0_i32, %c0_i32_0 : i32, i32
  }
  func.func @transform_6(%arg0: i32) -> (i32, i32) {
    %c0_i32 = arith.constant 0 : i32
    %c0_i32_0 = arith.constant 0 : i32
    %c0_i32_1 = arith.constant 0 : i32
    return %c0_i32, %c0_i32_0 : i32, i32
  }
  func.func @transform_7(%arg0: i32) -> (i32, i32) {
    %c0_i32 = arith.constant 0 : i32
    %c0_i32_0 = arith.constant 0 : i32
    %c0_i32_1 = arith.constant 0 : i32
    return %c0_i32, %c0_i32_0 : i32, i32
  }
  func.func @transform_8(%arg0: i32) -> (i32, i32) {
    %c0_i32 = arith.constant 0 : i32
    %c0_i32_0 = arith.constant 0 : i32
    %c0_i32_1 = arith.constant 0 : i32
    return %c0_i32, %c0_i32_0 : i32, i32
  }
  func.func @transform_9(%arg0: i32) -> (i32, i32) {
    %c0_i32 = arith.constant 0 : i32
    %c0_i32_0 = arith.constant 0 : i32
    return %c0_i32, %arg0 : i32, i32
  }
}

</mosaic_0001>

<llo_original>
// kernel: tpu_custom_call.1
$region0: #{tpu_custom_call.1}
  #allocation0 [shape = 'u32[]', space=smem, size = 0x4, offset = 0x4, fixed_abs, tag = 'smem constant byte address 0x4 - core index']
  #allocation1 [shape = 'u32[144,128]{1,0:T(1,128)}', space=vmem, size = 0x12000, scoped, tag = 'internal scratch']
  #allocation2 [shape = 'f32[1,1]{1,0:T(1,128)S(6)}', space=smem, size = 0x200, scoped, tag = 'scoped memory for tpu_custom_call.1']
  %s0 = inlined_call_operand.vmem [shape: f32[500,16], index: 0, kind: input, shape index: {}]
  %s1 = inlined_call_operand.vmem [shape: bf16[16,32], index: 1, kind: input, shape index: {}]
  %s2 = inlined_call_operand.vmem [shape: f32[1,32], index: 2, kind: input, shape index: {}]
  %s3 = inlined_call_operand.vmem [shape: bf16[32,32], index: 3, kind: input, shape index: {}]
  %s4 = inlined_call_operand.vmem [shape: f32[1,32], index: 4, kind: input, shape index: {}]
  %s5 = inlined_call_operand.vmem [shape: bf16[32,32], index: 5, kind: input, shape index: {}]
  %s6 = inlined_call_operand.vmem [shape: f32[1,32], index: 6, kind: input, shape index: {}]
  %s7 = inlined_call_operand.vmem [shape: bf16[1,32], index: 7, kind: input, shape index: {}]
  %s8 = inlined_call_operand.<no memory space> [shape: f32[1,1], index: 8, kind: input, shape index: {}]
  %s9 = inlined_call_operand.hbm [shape: f32[1,500], index: 9, kind: output, shape index: {}]
  %s10 = sld [smem:[#allocation0]]
  $region69: #{tpu_custom_call.1} parent=0
    _
  %s12 = ssub.s32 1, %s10
  %s13 = scalar_select 0, %s12, %s10
  %14 = sst [smem:[#allocation2]] %s8
  $region1: #{tpu_custom_call.1} parent=0
    #allocation3 [shape = 'u8[2048]{0}', space=vmem, size = 0x800, scoped, tag = 'output window, operand 0']
    #allocation4 [shape = 's32[2]{0}', space=sflag, size = 0x8, scoped, tag = 'scoped memory for tpu_custom_call.1']
    %15 = vsyncpa [#allocation4], 0
    %s16 = scalar_lea.sflag [#allocation4], 1
    %17 = vsyncpa %s16, 0
    loop: start=0, step=1, limit=4
    $region2: #{tpu_custom_call.1} parent=1 // loop_pre_header
      _
    $region3: #{tpu_custom_call.1} parent=1 // loop_header
      %s19 = sphi 0, %s23
      %p20 = scmp.ge.s32.totalorder %s19, 4
      %s29 = sphi 0, %s31
      %s32 = sphi 0, %s29
      %s33 = sphi 0, %s32
      %s49 = sphi 0, %s33
      %s53 = sphi 0, %s53
      %s55 = sphi 0, %s53
      %s56 = sphi 0, %s55
      %s70 = sphi 0, %s56
      %s74 = sphi 0, %s74
      %s76 = sphi 0, %s74
      %s77 = sphi 0, %s76
      %s91 = sphi 0, %s77
      %s95 = sphi 0, %s95
      %s97 = sphi 0, %s95
      %s98 = sphi 0, %s97
      %s112 = sphi 0, %s98
      %s116 = sphi 0, %s116
      %s118 = sphi 0, %s116
      %s119 = sphi 0, %s118
      %s133 = sphi 0, %s119
      %s137 = sphi 0, %s137
      %s139 = sphi 0, %s137
      %s140 = sphi 0, %s139
      %s154 = sphi 0, %s140
      %s158 = sphi 0, %s158
      %s160 = sphi 0, %s158
      %s161 = sphi 0, %s160
      %s175 = sphi 0, %s161
      %s179 = sphi 0, %s179
      %s181 = sphi 0, %s179
      %s182 = sphi 0, %s181
      %s196 = sphi 0, %s182
      %s200 = sphi 0, %s200
      %s202 = sphi 0, %s200
      %s203 = sphi 0, %s202
      %s217 = sphi 0, %s203
      %s223 = sphi 0, %s225
      %s226 = sphi 0, %s223
      %s227 = sphi 0, %s226
      %s243 = sphi 0, %s227
    $region4: #{tpu_custom_call.1} parent=1 // loop_header_branch
      %22 = sbr.rel (%p20) target = $region8
    $region5: #{tpu_custom_call.1} parent=1 // loop_body
      %s24 = ssub.s32 %s19, 1
      %s25 = ssub.s32 %s19, 2
      %s26 = sadd.s32 %s19, 1
      %s27 = ssub.s32 %s19, %s26
      %p28 = scmp.eq.s32.totalorder %s27, 0
      %s30 = sadd.s32 %s29, 1
      %s31 = scalar_select %p28, %s29, %s30
      %p34 = pneg %p28
      %p35 = scmp.eq.s32.totalorder %s19, 1
      %p36 = por %p34, %p35
      %p37 = scmp.ne.s32.totalorder %s29, %s32
      %p38 = scmp.eq.s32.totalorder %s19, 0
      %p39 = por %p37, %p38
      %p40 = scmp.ne.s32.totalorder %s29, %s32
      %p41 = scmp.eq.s32.totalorder %s24, 1
      %p42 = por %p40, %p41
      %p43 = scmp.ne.s32.totalorder %s32, %s33
      %p44 = scmp.eq.s32.totalorder %s24, 0
      %p45 = por %p43, %p44
      %p46 = scmp.ne.s32.totalorder %s32, %s33
      %p47 = scmp.eq.s32.totalorder %s25, 1
      %p48 = por %p46, %p47
      %p50 = scmp.ne.s32.totalorder %s33, %s49
      %p51 = scmp.eq.s32.totalorder %s25, 0
      %p52 = por %p50, %p51
      %s54 = sadd.s32 %s53, 1
      %p57 = scmp.eq.s32.totalorder %s19, 1
      %p58 = scmp.ne.s32.totalorder %s53, %s55
      %p59 = scmp.eq.s32.totalorder %s19, 0
      %p60 = por %p58, %p59
      %p61 = scmp.ne.s32.totalorder %s53, %s55
      %p62 = scmp.eq.s32.totalorder %s24, 1
      %p63 = por %p61, %p62
      %p64 = scmp.ne.s32.totalorder %s55, %s56
      %p65 = scmp.eq.s32.totalorder %s24, 0
      %p66 = por %p64, %p65
      %p67 = scmp.ne.s32.totalorder %s55, %s56
      %p68 = scmp.eq.s32.totalorder %s25, 1
      %p69 = por %p67, %p68
      %p71 = scmp.ne.s32.totalorder %s56, %s70
      %p72 = scmp.eq.s32.totalorder %s25, 0
      %p73 = por %p71, %p72
      %s75 = sadd.s32 %s74, 1
      %p78 = scmp.eq.s32.totalorder %s19, 1
      %p79 = scmp.ne.s32.totalorder %s74, %s76
      %p80 = scmp.eq.s32.totalorder %s19, 0
      %p81 = por %p79, %p80
      %p82 = scmp.ne.s32.totalorder %s74, %s76
      %p83 = scmp.eq.s32.totalorder %s24, 1
      %p84 = por %p82, %p83
      %p85 = scmp.ne.s32.totalorder %s76, %s77
      %p86 = scmp.eq.s32.totalorder %s24, 0
      %p87 = por %p85, %p86
      %p88 = scmp.ne.s32.totalorder %s76, %s77
      %p89 = scmp.eq.s32.totalorder %s25, 1
      %p90 = por %p88, %p89
      %p92 = scmp.ne.s32.totalorder %s77, %s91
      %p93 = scmp.eq.s32.totalorder %s25, 0
      %p94 = por %p92, %p93
      %s96 = sadd.s32 %s95, 1
      %p99 = scmp.eq.s32.totalorder %s19, 1
      %p100 = scmp.ne.s32.totalorder %s95, %s97
      %p101 = scmp.eq.s32.totalorder %s19, 0
      %p102 = por %p100, %p101
      %p103 = scmp.ne.s32.totalorder %s95, %s97
      %p104 = scmp.eq.s32.totalorder %s24, 1
      %p105 = por %p103, %p104
      %p106 = scmp.ne.s32.totalorder %s97, %s98
      %p107 = scmp.eq.s32.totalorder %s24, 0
      %p108 = por %p106, %p107
      %p109 = scmp.ne.s32.totalorder %s97, %s98
      %p110 = scmp.eq.s32.totalorder %s25, 1
      %p111 = por %p109, %p110
      %p113 = scmp.ne.s32.totalorder %s98, %s112
      %p114 = scmp.eq.s32.totalorder %s25, 0
      %p115 = por %p113, %p114
      %s117 = sadd.s32 %s116, 1
      %p120 = scmp.eq.s32.totalorder %s19, 1
      %p121 = scmp.ne.s32.totalorder %s116, %s118
      %p122 = scmp.eq.s32.totalorder %s19, 0
      %p123 = por %p121, %p122
      %p124 = scmp.ne.s32.totalorder %s116, %s118
      %p125 = scmp.eq.s32.totalorder %s24, 1
      %p126 = por %p124, %p125
      %p127 = scmp.ne.s32.totalorder %s118, %s119
      %p128 = scmp.eq.s32.totalorder %s24, 0
      %p129 = por %p127, %p128
      %p130 = scmp.ne.s32.totalorder %s118, %s119
      %p131 = scmp.eq.s32.totalorder %s25, 1
      %p132 = por %p130, %p131
      %p134 = scmp.ne.s32.totalorder %s119, %s133
      %p135 = scmp.eq.s32.totalorder %s25, 0
      %p136 = por %p134, %p135
      %s138 = sadd.s32 %s137, 1
      %p141 = scmp.eq.s32.totalorder %s19, 1
      %p142 = scmp.ne.s32.totalorder %s137, %s139
      %p143 = scmp.eq.s32.totalorder %s19, 0
      %p144 = por %p142, %p143
      %p145 = scmp.ne.s32.totalorder %s137, %s139
      %p146 = scmp.eq.s32.totalorder %s24, 1
      %p147 = por %p145, %p146
      %p148 = scmp.ne.s32.totalorder %s139, %s140
      %p149 = scmp.eq.s32.totalorder %s24, 0
      %p150 = por %p148, %p149
      %p151 = scmp.ne.s32.totalorder %s139, %s140
      %p152 = scmp.eq.s32.totalorder %s25, 1
      %p153 = por %p151, %p152
      %p155 = scmp.ne.s32.totalorder %s140, %s154
      %p156 = scmp.eq.s32.totalorder %s25, 0
      %p157 = por %p155, %p156
      %s159 = sadd.s32 %s158, 1
      %p162 = scmp.eq.s32.totalorder %s19, 1
      %p163 = scmp.ne.s32.totalorder %s158, %s160
      %p164 = scmp.eq.s32.totalorder %s19, 0
      %p165 = por %p163, %p164
      %p166 = scmp.ne.s32.totalorder %s158, %s160
      %p167 = scmp.eq.s32.totalorder %s24, 1
      %p168 = por %p166, %p167
      %p169 = scmp.ne.s32.totalorder %s160, %s161
      %p170 = scmp.eq.s32.totalorder %s24, 0
      %p171 = por %p169, %p170
      %p172 = scmp.ne.s32.totalorder %s160, %s161
      %p173 = scmp.eq.s32.totalorder %s25, 1
      %p174 = por %p172, %p173
      %p176 = scmp.ne.s32.totalorder %s161, %s175
      %p177 = scmp.eq.s32.totalorder %s25, 0
      %p178 = por %p176, %p177
      %s180 = sadd.s32 %s179, 1
      %p183 = scmp.eq.s32.totalorder %s19, 1
      %p184 = scmp.ne.s32.totalorder %s179, %s181
      %p185 = scmp.eq.s32.totalorder %s19, 0
      %p186 = por %p184, %p185
      %p187 = scmp.ne.s32.totalorder %s179, %s181
      %p188 = scmp.eq.s32.totalorder %s24, 1
      %p189 = por %p187, %p188
      %p190 = scmp.ne.s32.totalorder %s181, %s182
      %p191 = scmp.eq.s32.totalorder %s24, 0
      %p192 = por %p190, %p191
      %p193 = scmp.ne.s32.totalorder %s181, %s182
      %p194 = scmp.eq.s32.totalorder %s25, 1
      %p195 = por %p193, %p194
      %p197 = scmp.ne.s32.totalorder %s182, %s196
      %p198 = scmp.eq.s32.totalorder %s25, 0
      %p199 = por %p197, %p198
      %s201 = sadd.s32 %s200, 1
      %p204 = scmp.eq.s32.totalorder %s19, 1
      %p205 = scmp.ne.s32.totalorder %s200, %s202
      %p206 = scmp.eq.s32.totalorder %s19, 0
      %p207 = por %p205, %p206
      %p208 = scmp.ne.s32.totalorder %s200, %s202
      %p209 = scmp.eq.s32.totalorder %s24, 1
      %p210 = por %p208, %p209
      %p211 = scmp.ne.s32.totalorder %s202, %s203
      %p212 = scmp.eq.s32.totalorder %s24, 0
      %p213 = por %p211, %p212
      %p214 = scmp.ne.s32.totalorder %s202, %s203
      %p215 = scmp.eq.s32.totalorder %s25, 1
      %p216 = por %p214, %p215
      %p218 = scmp.ne.s32.totalorder %s203, %s217
      %p219 = scmp.eq.s32.totalorder %s25, 0
      %p220 = por %p218, %p219
      %s221 = ssub.s32 %s19, %s26
      %p222 = scmp.eq.s32.totalorder %s221, 0
      %s224 = sadd.s32 %s223, 1
      %s225 = scalar_select %p222, %s223, %s224
      %p228 = pneg %p222
      %p229 = scmp.eq.s32.totalorder %s19, 1
      %p230 = por %p228, %p229
      %p231 = scmp.ne.s32.totalorder %s223, %s226
      %p232 = scmp.eq.s32.totalorder %s19, 0
      %p233 = por %p231, %p232
      %p234 = scmp.ne.s32.totalorder %s223, %s226
      %p235 = scmp.eq.s32.totalorder %s24, 1
      %p236 = por %p234, %p235
      %p237 = scmp.ne.s32.totalorder %s226, %s227
      %p238 = scmp.eq.s32.totalorder %s24, 0
      %p239 = por %p237, %p238
      %p240 = scmp.ne.s32.totalorder %s226, %s227
      %p241 = scmp.eq.s32.totalorder %s25, 1
      %p242 = por %p240, %p241
      %p244 = scmp.ne.s32.totalorder %s227, %s243
      %p245 = scmp.eq.s32.totalorder %s25, 0
      %p246 = por %p244, %p245
      %p247 = scmp.le.s32.totalorder 1, %s19
      %p248 = scmp.lt.s32.totalorder %s19, 3
      %p249 = pnand %p247, %p248
      %p250 = pneg %p249
      // Predicated region
      $region9: #{tpu_custom_call.1} parent=5 // pred_check
        _
      $region10: #{tpu_custom_call.1} parent=5 // pred_check_branch
        %252 = sbr.rel (%p249) target = $region12
      $region11: #{tpu_custom_call.1} parent=5 // pred_region
        %s253 = ssub.s32 %s19, 1
        // Predicated region
        $region13: #{tpu_custom_call.1} parent=11 // pred_check
          %p254 = pneg %p66
        $region14: #{tpu_custom_call.1} parent=11 // pred_check_branch
          %256 = sbr.rel (%p254) target = $region16
        $region15: #{tpu_custom_call.1} parent=11 // pred_region
          _
        $region16: #{tpu_custom_call.1} parent=11 // pred_fallthru
          _
        // Predicated region
        $region17: #{tpu_custom_call.1} parent=11 // pred_check
          %p257 = pneg %p87
        $region18: #{tpu_custom_call.1} parent=11 // pred_check_branch
          %259 = sbr.rel (%p257) target = $region20
        $region19: #{tpu_custom_call.1} parent=11 // pred_region
          _
        $region20: #{tpu_custom_call.1} parent=11 // pred_fallthru
          _
        // Predicated region
        $region21: #{tpu_custom_call.1} parent=11 // pred_check
          %p260 = pneg %p108
        $region22: #{tpu_custom_call.1} parent=11 // pred_check_branch
          %262 = sbr.rel (%p260) target = $region24
        $region23: #{tpu_custom_call.1} parent=11 // pred_region
          _
        $region24: #{tpu_custom_call.1} parent=11 // pred_fallthru
          _
        // Predicated region
        $region25: #{tpu_custom_call.1} parent=11 // pred_check
          %p263 = pneg %p129
        $region26: #{tpu_custom_call.1} parent=11 // pred_check_branch
          %265 = sbr.rel (%p263) target = $region28
        $region27: #{tpu_custom_call.1} parent=11 // pred_region
          _
        $region28: #{tpu_custom_call.1} parent=11 // pred_fallthru
          _
        // Predicated region
        $region29: #{tpu_custom_call.1} parent=11 // pred_check
          %p266 = pneg %p150
        $region30: #{tpu_custom_call.1} parent=11 // pred_check_branch
          %268 = sbr.rel (%p266) target = $region32
        $region31: #{tpu_custom_call.1} parent=11 // pred_region
          _
        $region32: #{tpu_custom_call.1} parent=11 // pred_fallthru
          _
        // Predicated region
        $region33: #{tpu_custom_call.1} parent=11 // pred_check
          %p269 = pneg %p171
        $region34: #{tpu_custom_call.1} parent=11 // pred_check_branch
          %271 = sbr.rel (%p269) target = $region36
        $region35: #{tpu_custom_call.1} parent=11 // pred_region
          _
        $region36: #{tpu_custom_call.1} parent=11 // pred_fallthru
          _
        // Predicated region
        $region37: #{tpu_custom_call.1} parent=11 // pred_check
          %p272 = pneg %p192
        $region38: #{tpu_custom_call.1} parent=11 // pred_check_branch
          %274 = sbr.rel (%p272) target = $region40
        $region39: #{tpu_custom_call.1} parent=11 // pred_region
          _
        $region40: #{tpu_custom_call.1} parent=11 // pred_fallthru
          _
        // Predicated region
        $region41: #{tpu_custom_call.1} parent=11 // pred_check
          %p275 = pneg %p213
        $region42: #{tpu_custom_call.1} parent=11 // pred_check_branch
          %277 = sbr.rel (%p275) target = $region44
        $region43: #{tpu_custom_call.1} parent=11 // pred_region
          _
        $region44: #{tpu_custom_call.1} parent=11 // pred_fallthru
          _
      $region12: #{tpu_custom_call.1} parent=5 // pred_fallthru
        _
      %p278 = scmp.lt.s32.totalorder %s19, 2
      // Predicated region
      $region45: #{tpu_custom_call.1} parent=5 // pred_check
        %p279 = pneg %p278
      $region46: #{tpu_custom_call.1} parent=5 // pred_check_branch
        %281 = sbr.rel (%p279) target = $region48
      $region47: #{tpu_custom_call.1} parent=5 // pred_region
        // Predicated region
        $region49: #{tpu_custom_call.1} parent=47 // pred_check
          %p282 = pneg %p39
        $region50: #{tpu_custom_call.1} parent=47 // pred_check_branch
          %284 = sbr.rel (%p282) target = $region52
        $region51: #{tpu_custom_call.1} parent=47 // pred_region
          %s285 = smul.u32 32, %s19
          %s286 = ssub.s32 63, %s285
          %p287 = scmp.lt.s32.totalorder %s286, 32
          %s288 = scalar_select %p287, %s286, 32
          %s289 = smul.u32 128, %s288
          %p290 = scmp.lt.s32.totalorder %s285, 62
          %s291 = scalar_select %p290, %s285, 62
          %s292 = smul.addr %s291, 8
          %s293 = scalar_lea.vmem %s0, %s292
          %s294 = smul.u32 32, %s19
          %s295 = ssub.s32 63, %s294
          %p296 = scmp.lt.s32.totalorder %s295, 32
          %s297 = scalar_select %p296, %s295, 32
          %s298 = smul.u32 128, %s297
        $region52: #{tpu_custom_call.1} parent=47 // pred_fallthru
          _
      $region48: #{tpu_custom_call.1} parent=5 // pred_fallthru
        _
      %p299 = scmp.le.s32.totalorder 1, %s19
      %p300 = scmp.lt.s32.totalorder %s19, 3
      %p301 = pnand %p299, %p300
      %p302 = pneg %p301
      // Predicated region
      $region53: #{tpu_custom_call.1} parent=5 // pred_check
        _
      $region54: #{tpu_custom_call.1} parent=5 // pred_check_branch
        %304 = sbr.rel (%p301) target = $region56
      $region55: #{tpu_custom_call.1} parent=5 // pred_region
        %s305 = ssub.s32 %s19, 1
        %s306 = smul.u32 32, %s24
        %s307 = ssub.s32 63, %s306
        %p308 = scmp.lt.s32.totalorder %s307, 32
        %s309 = scalar_select %p308, %s307, 32
        %s310 = smul.u32 128, %s309
        %p311 = scmp.lt.s32.totalorder %s306, 62
        %s312 = scalar_select %p311, %s306, 62
        %s313 = smul.addr %s312, 8
        %s314 = scalar_lea.vmem %s0, %s313
        %p315 = pneg %p45
        %p316 = pneg %p42
        %p317 = pneg %p66
        %p318 = pneg %p63
        %p319 = pneg %p87
        %p320 = pneg %p84
        %p321 = pneg %p108
        %p322 = pneg %p105
        %p323 = pneg %p129
        %p324 = pneg %p126
        %p325 = pneg %p150
        %p326 = pneg %p147
        %p327 = pneg %p171
        %p328 = pneg %p168
        %p329 = pneg %p192
        %p330 = pneg %p189
        %p331 = pneg %p213
        %p332 = pneg %p210
        %p333 = pneg %p239
        %p334 = pneg %p236
        %s335 = sand.u32 %s226, 1
        %s336 = scalar_lea.sflag [#allocation4], %s335
        %s337 = sand.u32 %s226, 1
        %s338 = smul.addr %s337, 2
        %s339 = scalar_lea.vmem [#allocation3], %s338
        %s340 = smul.u32 32, %s24
        %s341 = ssub.s32 63, %s340
        %p342 = scmp.lt.s32.totalorder %s341, 32
        %s343 = scalar_select %p342, %s341, 32
        %s344 = smul.u32 128, %s343
        %p345 = scmp.lt.s32.totalorder %s340, 62
        %s346 = scalar_select %p345, %s340, 62
        %s347 = smul.addr %s346, 8
        %s348 = scalar_lea.vmem %s0, %s347
        %s349 = smul.u32 32, %s24
        %s350 = ssub.s32 63, %s349
        %p351 = scmp.lt.s32.totalorder %s350, 32
        %s352 = scalar_select %p351, %s350, 32
        %s353 = smul.u32 128, %s352
        %s354 = smul.u32 2, %s24
        %v356 = vld [vmem:[%s348] sm:$0xff]
        %v357 = vld [vmem:[%s348 + $0x8] sm:$0xff]
        %v358 = vld [vmem:[%s348 + $0x10] sm:$0xff]
        %v359 = vld [vmem:[%s348 + $0x18] sm:$0xff]
        %v360 = vld [vmem:[%s348 + $0x20] sm:$0xff]
        %v361 = vld [vmem:[%s348 + $0x28] sm:$0xff]
        %v362 = vld [vmem:[%s348 + $0x30] sm:$0xff]
        %v363 = vld [vmem:[%s348 + $0x38] sm:$0xff]
        %v364 = vld [vmem:[%s348 + $0x40] sm:$0xff]
        %v365 = vld [vmem:[%s348 + $0x48] sm:$0xff]
        %v366 = vld [vmem:[%s348 + $0x50] sm:$0xff]
        %v367 = vld [vmem:[%s348 + $0x58] sm:$0xff]
        %v368 = vld [vmem:[%s348 + $0x60] sm:$0xff]
        %v369 = vld [vmem:[%s348 + $0x68] sm:$0xff]
        %v370 = vld [vmem:[%s348 + $0x70] sm:$0xff]
        %v371 = vld [vmem:[%s348 + $0x78] sm:$0xff]
        %v372 = vld [vmem:[%s348 + $0x80] sm:$0xff]
        %v373 = vld [vmem:[%s348 + $0x88] sm:$0xff]
        %v374 = vld [vmem:[%s348 + $0x90] sm:$0xff]
        %v375 = vld [vmem:[%s348 + $0x98] sm:$0xff]
        %v376 = vld [vmem:[%s348 + $0xa0] sm:$0xff]
        %v377 = vld [vmem:[%s348 + $0xa8] sm:$0xff]
        %v378 = vld [vmem:[%s348 + $0xb0] sm:$0xff]
        %v379 = vld [vmem:[%s348 + $0xb8] sm:$0xff]
        %v380 = vld [vmem:[%s348 + $0xc0] sm:$0xff]
        %v381 = vld [vmem:[%s348 + $0xc8] sm:$0xff]
        %v382 = vld [vmem:[%s348 + $0xd0] sm:$0xff]
        %v383 = vld [vmem:[%s348 + $0xd8] sm:$0xff]
        %v384 = vld [vmem:[%s348 + $0xe0] sm:$0xff]
        %v385 = vld [vmem:[%s348 + $0xe8] sm:$0xff]
        %v386 = vld [vmem:[%s348 + $0xf0] sm:$0xff]
        %v387 = vld [vmem:[%s348 + $0xf8] sm:$0xff]
        %v388 = vpack.c.bf16 %v357, %v356
        %v389 = vpack.c.bf16 %v359, %v358
        %v390 = vpack.c.bf16 %v361, %v360
        %v391 = vpack.c.bf16 %v363, %v362
        %v392 = vpack.c.bf16 %v365, %v364
        %v393 = vpack.c.bf16 %v367, %v366
        %v394 = vpack.c.bf16 %v369, %v368
        %v395 = vpack.c.bf16 %v371, %v370
        %v396 = vpack.c.bf16 %v373, %v372
        %v397 = vpack.c.bf16 %v375, %v374
        %v398 = vpack.c.bf16 %v377, %v376
        %v399 = vpack.c.bf16 %v379, %v378
        %v400 = vpack.c.bf16 %v381, %v380
        %v401 = vpack.c.bf16 %v383, %v382
        %v402 = vpack.c.bf16 %v385, %v384
        %v403 = vpack.c.bf16 %v387, %v386
        %v404 = vld [vmem:[%s1] sm:$0xf]
        %v405 = vld [vmem:[%s1 + $0x4] sm:$0xf]
        %v406 = vld [vmem:[%s2] sm:$0x1]
        %v408 = vlaneseq
        %v409 = vshrl.u32 %v408, 7
        %v410 = vsub.s32 0, %v409
        %v411 = vrot.slane %v406, %v410
        %v415 = vunpack.c.l.b16 %v404
        %v416 = vunpack.c.l.b16 %v405
        %v417 = vpack.c.b16 %v416, %v415
        %vm419 = vcmask 130048
        %v421 = vsel %vm419, %v388, 0
        %v424 = vsel %vm419, %v389, 0
        %v427 = vsel %vm419, %v390, 0
        %v430 = vsel %vm419, %v391, 0
        %v433 = vsel %vm419, %v392, 0
        %v436 = vsel %vm419, %v393, 0
        %v439 = vsel %vm419, %v394, 0
        %v442 = vsel %vm419, %v395, 0
        %v445 = vsel %vm419, %v396, 0
        %v448 = vsel %vm419, %v397, 0
        %v451 = vsel %vm419, %v398, 0
        %v454 = vsel %vm419, %v399, 0
        %v457 = vsel %vm419, %v400, 0
        %v460 = vsel %vm419, %v401, 0
        %v463 = vsel %vm419, %v402, 0
        %v466 = vsel %vm419, %v403, 0
        %468 = vmatprep.subr.bf16.mxu0 0
        %469 = vmatpush1.bf16.msra.mxu0 0
        %470 = vmatprep.subr.bf16.mxu0 0
        %471 = vmatpush1.bf16.msra.mxu0 0
        %472 = vmatprep.subr.bf16.mxu0 0
        %473 = vmatpush1.bf16.msra.mxu0 0
        %474 = vmatprep.subr.bf16.mxu0 0
        %475 = vmatpush1.bf16.msra.mxu0 0
        %476 = vmatprep.subr.bf16.mxu0 0
        %477 = vmatpush1.bf16.msra.mxu0 0
        %478 = vmatprep.subr.bf16.mxu0 0
        %479 = vmatpush1.bf16.msra.mxu0 0
        %480 = vmatprep.subr.bf16.mxu0 0
        %481 = vmatpush1.bf16.msra.mxu0 0
        %482 = vmatprep.subr.bf16.mxu0 0
        %483 = vmatpush1.bf16.msra.mxu0 %v417
        %484 = vmatprep.subr.bf16.mxu0 0
        %485 = vmatpush2.bf16.msra.mxu0 0
        %486 = vmatprep.subr.bf16.mxu0 0
        %487 = vmatpush2.bf16.msra.mxu0 0
        %488 = vmatprep.subr.bf16.mxu0 0
        %489 = vmatpush2.bf16.msra.mxu0 0
        %490 = vmatprep.subr.bf16.mxu0 0
        %491 = vmatpush2.bf16.msra.mxu0 0
        %492 = vmatprep.subr.bf16.mxu0 0
        %493 = vmatpush2.bf16.msra.mxu0 0
        %494 = vmatprep.subr.bf16.mxu0 0
        %495 = vmatpush2.bf16.msra.mxu0 0
        %496 = vmatprep.subr.bf16.mxu0 0
        %497 = vmatpush2.bf16.msra.mxu0 0
        %498 = vmatprep.subr.bf16.mxu0 0
        %499 = vmatpush2.bf16.msra.mxu0 0
        %500 = vmatprep.mubr.bf16.mxu0 0
        %501 = vmatmul.mubr.bf16.gmra.mxu0 %v421
        %v502 = vpop.f32.mrf.mxu0
        %v503 = vadd.f32 %v411, %v502
        %v504 = vpop.f32.mrf.mxu0
        %v505 = vpop.f32.mrf.mxu0
        %v506 = vadd.f32 %v411, %v505
        %v507 = vpop.f32.mrf.mxu0
        %508 = vmatprep.mubr.bf16.mxu0 0
        %509 = vmatmul.mubr.bf16.gmra.mxu0 %v424
        %v510 = vpop.f32.mrf.mxu0
        %v511 = vadd.f32 %v411, %v510
        %v512 = vpop.f32.mrf.mxu0
        %v513 = vpop.f32.mrf.mxu0
        %v514 = vadd.f32 %v411, %v513
        %v515 = vpop.f32.mrf.mxu0
        %516 = vmatprep.mubr.bf16.mxu0 0
        %517 = vmatmul.mubr.bf16.gmra.mxu0 %v427
        %v518 = vpop.f32.mrf.mxu0
        %v519 = vadd.f32 %v411, %v518
        %v520 = vpop.f32.mrf.mxu0
        %v521 = vpop.f32.mrf.mxu0
        %v522 = vadd.f32 %v411, %v521
        %v523 = vpop.f32.mrf.mxu0
        %524 = vmatprep.mubr.bf16.mxu0 0
        %525 = vmatmul.mubr.bf16.gmra.mxu0 %v430
        %v526 = vpop.f32.mrf.mxu0
        %v527 = vadd.f32 %v411, %v526
        %v528 = vpop.f32.mrf.mxu0
        %v529 = vpop.f32.mrf.mxu0
        %v530 = vadd.f32 %v411, %v529
        %v531 = vpop.f32.mrf.mxu0
        %532 = vmatprep.mubr.bf16.mxu0 0
        %533 = vmatmul.mubr.bf16.gmra.mxu0 %v433
        %v534 = vpop.f32.mrf.mxu0
        %v535 = vadd.f32 %v411, %v534
        %v536 = vpop.f32.mrf.mxu0
        %v537 = vpop.f32.mrf.mxu0
        %v538 = vadd.f32 %v411, %v537
        %v539 = vpop.f32.mrf.mxu0
        %540 = vmatprep.mubr.bf16.mxu0 0
        %541 = vmatmul.mubr.bf16.gmra.mxu0 %v436
        %v542 = vpop.f32.mrf.mxu0
        %v543 = vadd.f32 %v411, %v542
        %v544 = vpop.f32.mrf.mxu0
        %v545 = vpop.f32.mrf.mxu0
        %v546 = vadd.f32 %v411, %v545
        %v547 = vpop.f32.mrf.mxu0
        %548 = vmatprep.mubr.bf16.mxu0 0
        %549 = vmatmul.mubr.bf16.gmra.mxu0 %v439
        %v550 = vpop.f32.mrf.mxu0
        %v551 = vadd.f32 %v411, %v550
        %v552 = vpop.f32.mrf.mxu0
        %v553 = vpop.f32.mrf.mxu0
        %v554 = vadd.f32 %v411, %v553
        %v555 = vpop.f32.mrf.mxu0
        %556 = vmatprep.mubr.bf16.mxu0 0
        %557 = vmatmul.mubr.bf16.gmra.mxu0 %v442
        %v558 = vpop.f32.mrf.mxu0
        %v559 = vadd.f32 %v411, %v558
        %v560 = vpop.f32.mrf.mxu0
        %v561 = vpop.f32.mrf.mxu0
        %v562 = vadd.f32 %v411, %v561
        %v563 = vpop.f32.mrf.mxu0
        %564 = vmatprep.mubr.bf16.mxu0 0
        %565 = vmatmul.mubr.bf16.gmra.mxu0 %v445
        %v566 = vpop.f32.mrf.mxu0
        %v567 = vadd.f32 %v411, %v566
        %v568 = vpop.f32.mrf.mxu0
        %v569 = vpop.f32.mrf.mxu0
        %v570 = vadd.f32 %v411, %v569
        %v571 = vpop.f32.mrf.mxu0
        %572 = vmatprep.mubr.bf16.mxu0 0
        %573 = vmatmul.mubr.bf16.gmra.mxu0 %v448
        %v574 = vpop.f32.mrf.mxu0
        %v575 = vadd.f32 %v411, %v574
        %v576 = vpop.f32.mrf.mxu0
        %v577 = vpop.f32.mrf.mxu0
        %v578 = vadd.f32 %v411, %v577
        %v579 = vpop.f32.mrf.mxu0
        %580 = vmatprep.mubr.bf16.mxu0 0
        %581 = vmatmul.mubr.bf16.gmra.mxu0 %v451
        %v582 = vpop.f32.mrf.mxu0
        %v583 = vadd.f32 %v411, %v582
        %v584 = vpop.f32.mrf.mxu0
        %v585 = vpop.f32.mrf.mxu0
        %v586 = vadd.f32 %v411, %v585
        %v587 = vpop.f32.mrf.mxu0
        %588 = vmatprep.mubr.bf16.mxu0 0
        %589 = vmatmul.mubr.bf16.gmra.mxu0 %v454
        %v590 = vpop.f32.mrf.mxu0
        %v591 = vadd.f32 %v411, %v590
        %v592 = vpop.f32.mrf.mxu0
        %v593 = vpop.f32.mrf.mxu0
        %v594 = vadd.f32 %v411, %v593
        %v595 = vpop.f32.mrf.mxu0
        %596 = vmatprep.mubr.bf16.mxu0 0
        %597 = vmatmul.mubr.bf16.gmra.mxu0 %v457
        %v598 = vpop.f32.mrf.mxu0
        %v599 = vadd.f32 %v411, %v598
        %v600 = vpop.f32.mrf.mxu0
        %v601 = vpop.f32.mrf.mxu0
        %v602 = vadd.f32 %v411, %v601
        %v603 = vpop.f32.mrf.mxu0
        %604 = vmatprep.mubr.bf16.mxu0 0
        %605 = vmatmul.mubr.bf16.gmra.mxu0 %v460
        %v606 = vpop.f32.mrf.mxu0
        %v607 = vadd.f32 %v411, %v606
        %v608 = vpop.f32.mrf.mxu0
        %v609 = vpop.f32.mrf.mxu0
        %v610 = vadd.f32 %v411, %v609
        %v611 = vpop.f32.mrf.mxu0
        %612 = vmatprep.mubr.bf16.mxu0 0
        %613 = vmatmul.mubr.bf16.gmra.mxu0 %v463
        %v614 = vpop.f32.mrf.mxu0
        %v615 = vadd.f32 %v411, %v614
        %v616 = vpop.f32.mrf.mxu0
        %v617 = vpop.f32.mrf.mxu0
        %v618 = vadd.f32 %v411, %v617
        %v619 = vpop.f32.mrf.mxu0
        %620 = vmatprep.mubr.bf16.mxu0 0
        %621 = vmatmul.mubr.bf16.gmra.mxu0 %v466
        %v622 = vpop.f32.mrf.mxu0
        %v623 = vadd.f32 %v411, %v622
        %v624 = vpop.f32.mrf.mxu0
        %v625 = vpop.f32.mrf.mxu0
        %v626 = vadd.f32 %v411, %v625
        %v627 = vpop.f32.mrf.mxu0
        %628 = vdwg.mxu0
        %v629 = vmax.f32 %v503, 0.0
        %v630 = vmax.f32 %v506, 0.0
        %v631 = vmax.f32 %v511, 0.0
        %v632 = vmax.f32 %v514, 0.0
        %v633 = vmax.f32 %v519, 0.0
        %v634 = vmax.f32 %v522, 0.0
        %v635 = vmax.f32 %v527, 0.0
        %v636 = vmax.f32 %v530, 0.0
        %v637 = vmax.f32 %v535, 0.0
        %v638 = vmax.f32 %v538, 0.0
        %v639 = vmax.f32 %v543, 0.0
        %v640 = vmax.f32 %v546, 0.0
        %v641 = vmax.f32 %v551, 0.0
        %v642 = vmax.f32 %v554, 0.0
        %v643 = vmax.f32 %v559, 0.0
        %v644 = vmax.f32 %v562, 0.0
        %v645 = vmax.f32 %v567, 0.0
        %v646 = vmax.f32 %v570, 0.0
        %v647 = vmax.f32 %v575, 0.0
        %v648 = vmax.f32 %v578, 0.0
        %v649 = vmax.f32 %v583, 0.0
        %v650 = vmax.f32 %v586, 0.0
        %v651 = vmax.f32 %v591, 0.0
        %v652 = vmax.f32 %v594, 0.0
        %v653 = vmax.f32 %v599, 0.0
        %v654 = vmax.f32 %v602, 0.0
        %v655 = vmax.f32 %v607, 0.0
        %v656 = vmax.f32 %v610, 0.0
        %v657 = vmax.f32 %v615, 0.0
        %v658 = vmax.f32 %v618, 0.0
        %v659 = vmax.f32 %v623, 0.0
        %v660 = vmax.f32 %v626, 0.0
        %v661 = vpack.c.bf16 %v630, %v629
        %v662 = vpack.c.bf16 %v632, %v631
        %v663 = vpack.c.bf16 %v634, %v633
        %v664 = vpack.c.bf16 %v636, %v635
        %v665 = vpack.c.bf16 %v638, %v637
        %v666 = vpack.c.bf16 %v640, %v639
        %v667 = vpack.c.bf16 %v642, %v641
        %v668 = vpack.c.bf16 %v644, %v643
        %v669 = vpack.c.bf16 %v646, %v645
        %v670 = vpack.c.bf16 %v648, %v647
        %v671 = vpack.c.bf16 %v650, %v649
        %v672 = vpack.c.bf16 %v652, %v651
        %v673 = vpack.c.bf16 %v654, %v653
        %v674 = vpack.c.bf16 %v656, %v655
        %v675 = vpack.c.bf16 %v658, %v657
        %v676 = vpack.c.bf16 %v660, %v659
        %v677 = vld [vmem:[%s3] sm:$0xf]
        %v678 = vld [vmem:[%s3 + $0x4] sm:$0xf]
        %v679 = vld [vmem:[%s3 + $0x8] sm:$0xf]
        %v680 = vld [vmem:[%s3 + $0xc] sm:$0xf]
        %v681 = vld [vmem:[%s4] sm:$0x1]
        %v683 = vlaneseq
        %v684 = vshrl.u32 %v683, 7
        %v685 = vsub.s32 0, %v684
        %v686 = vrot.slane %v681, %v685
        %v692 = vunpack.c.l.b16 %v677
        %v693 = vunpack.c.l.b16 %v678
        %v694 = vunpack.c.l.b16 %v679
        %v695 = vunpack.c.l.b16 %v680
        %v696 = vpack.c.b16 %v693, %v692
        %v697 = vpack.c.b16 %v695, %v694
        %vm700 = vcmask 261120
        %v702 = vsel %vm700, %v661, 0
        %v705 = vsel %vm700, %v662, 0
        %v708 = vsel %vm700, %v663, 0
        %v711 = vsel %vm700, %v664, 0
        %v714 = vsel %vm700, %v665, 0
        %v717 = vsel %vm700, %v666, 0
        %v720 = vsel %vm700, %v667, 0
        %v723 = vsel %vm700, %v668, 0
        %v726 = vsel %vm700, %v669, 0
        %v729 = vsel %vm700, %v670, 0
        %v732 = vsel %vm700, %v671, 0
        %v735 = vsel %vm700, %v672, 0
        %v738 = vsel %vm700, %v673, 0
        %v741 = vsel %vm700, %v674, 0
        %v744 = vsel %vm700, %v675, 0
        %v747 = vsel %vm700, %v676, 0
        %749 = vmatprep.subr.bf16.mxu0 0
        %750 = vmatpush1.bf16.msra.mxu0 0
        %751 = vmatprep.subr.bf16.mxu0 0
        %752 = vmatpush1.bf16.msra.mxu0 0
        %753 = vmatprep.subr.bf16.mxu0 0
        %754 = vmatpush1.bf16.msra.mxu0 0
        %755 = vmatprep.subr.bf16.mxu0 0
        %756 = vmatpush1.bf16.msra.mxu0 0
        %757 = vmatprep.subr.bf16.mxu0 0
        %758 = vmatpush1.bf16.msra.mxu0 0
        %759 = vmatprep.subr.bf16.mxu0 0
        %760 = vmatpush1.bf16.msra.mxu0 0
        %761 = vmatprep.subr.bf16.mxu0 0
        %762 = vmatpush1.bf16.msra.mxu0 %v697
        %763 = vmatprep.subr.bf16.mxu0 0
        %764 = vmatpush1.bf16.msra.mxu0 %v696
        %765 = vmatprep.subr.bf16.mxu0 0
        %766 = vmatpush2.bf16.msra.mxu0 0
        %767 = vmatprep.subr.bf16.mxu0 0
        %768 = vmatpush2.bf16.msra.mxu0 0
        %769 = vmatprep.subr.bf16.mxu0 0
        %770 = vmatpush2.bf16.msra.mxu0 0
        %771 = vmatprep.subr.bf16.mxu0 0
        %772 = vmatpush2.bf16.msra.mxu0 0
        %773 = vmatprep.subr.bf16.mxu0 0
        %774 = vmatpush2.bf16.msra.mxu0 0
        %775 = vmatprep.subr.bf16.mxu0 0
        %776 = vmatpush2.bf16.msra.mxu0 0
        %777 = vmatprep.subr.bf16.mxu0 0
        %778 = vmatpush2.bf16.msra.mxu0 0
        %779 = vmatprep.subr.bf16.mxu0 0
        %780 = vmatpush2.bf16.msra.mxu0 0
        %781 = vmatprep.mubr.bf16.mxu0 0
        %782 = vmatmul.mubr.bf16.gmra.mxu0 %v702
        %v783 = vpop.f32.mrf.mxu0
        %v784 = vadd.f32 %v686, %v783
        %v785 = vpop.f32.mrf.mxu0
        %v786 = vpop.f32.mrf.mxu0
        %v787 = vadd.f32 %v686, %v786
        %v788 = vpop.f32.mrf.mxu0
        %789 = vmatprep.mubr.bf16.mxu0 0
        %790 = vmatmul.mubr.bf16.gmra.mxu0 %v705
        %v791 = vpop.f32.mrf.mxu0
        %v792 = vadd.f32 %v686, %v791
        %v793 = vpop.f32.mrf.mxu0
        %v794 = vpop.f32.mrf.mxu0
        %v795 = vadd.f32 %v686, %v794
        %v796 = vpop.f32.mrf.mxu0
        %797 = vmatprep.mubr.bf16.mxu0 0
        %798 = vmatmul.mubr.bf16.gmra.mxu0 %v708
        %v799 = vpop.f32.mrf.mxu0
        %v800 = vadd.f32 %v686, %v799
        %v801 = vpop.f32.mrf.mxu0
        %v802 = vpop.f32.mrf.mxu0
        %v803 = vadd.f32 %v686, %v802
        %v804 = vpop.f32.mrf.mxu0
        %805 = vmatprep.mubr.bf16.mxu0 0
        %806 = vmatmul.mubr.bf16.gmra.mxu0 %v711
        %v807 = vpop.f32.mrf.mxu0
        %v808 = vadd.f32 %v686, %v807
        %v809 = vpop.f32.mrf.mxu0
        %v810 = vpop.f32.mrf.mxu0
        %v811 = vadd.f32 %v686, %v810
        %v812 = vpop.f32.mrf.mxu0
        %813 = vmatprep.mubr.bf16.mxu0 0
        %814 = vmatmul.mubr.bf16.gmra.mxu0 %v714
        %v815 = vpop.f32.mrf.mxu0
        %v816 = vadd.f32 %v686, %v815
        %v817 = vpop.f32.mrf.mxu0
        %v818 = vpop.f32.mrf.mxu0
        %v819 = vadd.f32 %v686, %v818
        %v820 = vpop.f32.mrf.mxu0
        %821 = vmatprep.mubr.bf16.mxu0 0
        %822 = vmatmul.mubr.bf16.gmra.mxu0 %v717
        %v823 = vpop.f32.mrf.mxu0
        %v824 = vadd.f32 %v686, %v823
        %v825 = vpop.f32.mrf.mxu0
        %v826 = vpop.f32.mrf.mxu0
        %v827 = vadd.f32 %v686, %v826
        %v828 = vpop.f32.mrf.mxu0
        %829 = vmatprep.mubr.bf16.mxu0 0
        %830 = vmatmul.mubr.bf16.gmra.mxu0 %v720
        %v831 = vpop.f32.mrf.mxu0
        %v832 = vadd.f32 %v686, %v831
        %v833 = vpop.f32.mrf.mxu0
        %v834 = vpop.f32.mrf.mxu0
        %v835 = vadd.f32 %v686, %v834
        %v836 = vpop.f32.mrf.mxu0
        %837 = vmatprep.mubr.bf16.mxu0 0
        %838 = vmatmul.mubr.bf16.gmra.mxu0 %v723
        %v839 = vpop.f32.mrf.mxu0
        %v840 = vadd.f32 %v686, %v839
        %v841 = vpop.f32.mrf.mxu0
        %v842 = vpop.f32.mrf.mxu0
        %v843 = vadd.f32 %v686, %v842
        %v844 = vpop.f32.mrf.mxu0
        %845 = vmatprep.mubr.bf16.mxu0 0
        %846 = vmatmul.mubr.bf16.gmra.mxu0 %v726
        %v847 = vpop.f32.mrf.mxu0
        %v848 = vadd.f32 %v686, %v847
        %v849 = vpop.f32.mrf.mxu0
        %v850 = vpop.f32.mrf.mxu0
        %v851 = vadd.f32 %v686, %v850
        %v852 = vpop.f32.mrf.mxu0
        %853 = vmatprep.mubr.bf16.mxu0 0
        %854 = vmatmul.mubr.bf16.gmra.mxu0 %v729
        %v855 = vpop.f32.mrf.mxu0
        %v856 = vadd.f32 %v686, %v855
        %v857 = vpop.f32.mrf.mxu0
        %v858 = vpop.f32.mrf.mxu0
        %v859 = vadd.f32 %v686, %v858
        %v860 = vpop.f32.mrf.mxu0
        %861 = vmatprep.mubr.bf16.mxu0 0
        %862 = vmatmul.mubr.bf16.gmra.mxu0 %v732
        %v863 = vpop.f32.mrf.mxu0
        %v864 = vadd.f32 %v686, %v863
        %v865 = vpop.f32.mrf.mxu0
        %v866 = vpop.f32.mrf.mxu0
        %v867 = vadd.f32 %v686, %v866
        %v868 = vpop.f32.mrf.mxu0
        %869 = vmatprep.mubr.bf16.mxu0 0
        %870 = vmatmul.mubr.bf16.gmra.mxu0 %v735
        %v871 = vpop.f32.mrf.mxu0
        %v872 = vadd.f32 %v686, %v871
        %v873 = vpop.f32.mrf.mxu0
        %v874 = vpop.f32.mrf.mxu0
        %v875 = vadd.f32 %v686, %v874
        %v876 = vpop.f32.mrf.mxu0
        %877 = vmatprep.mubr.bf16.mxu0 0
        %878 = vmatmul.mubr.bf16.gmra.mxu0 %v738
        %v879 = vpop.f32.mrf.mxu0
        %v880 = vadd.f32 %v686, %v879
        %v881 = vpop.f32.mrf.mxu0
        %v882 = vpop.f32.mrf.mxu0
        %v883 = vadd.f32 %v686, %v882
        %v884 = vpop.f32.mrf.mxu0
        %885 = vmatprep.mubr.bf16.mxu0 0
        %886 = vmatmul.mubr.bf16.gmra.mxu0 %v741
        %v887 = vpop.f32.mrf.mxu0
        %v888 = vadd.f32 %v686, %v887
        %v889 = vpop.f32.mrf.mxu0
        %v890 = vpop.f32.mrf.mxu0
        %v891 = vadd.f32 %v686, %v890
        %v892 = vpop.f32.mrf.mxu0
        %893 = vmatprep.mubr.bf16.mxu0 0
        %894 = vmatmul.mubr.bf16.gmra.mxu0 %v744
        %v895 = vpop.f32.mrf.mxu0
        %v896 = vadd.f32 %v686, %v895
        %v897 = vpop.f32.mrf.mxu0
        %v898 = vpop.f32.mrf.mxu0
        %v899 = vadd.f32 %v686, %v898
        %v900 = vpop.f32.mrf.mxu0
        %901 = vmatprep.mubr.bf16.mxu0 0
        %902 = vmatmul.mubr.bf16.gmra.mxu0 %v747
        %v903 = vpop.f32.mrf.mxu0
        %v904 = vadd.f32 %v686, %v903
        %v905 = vpop.f32.mrf.mxu0
        %v906 = vpop.f32.mrf.mxu0
        %v907 = vadd.f32 %v686, %v906
        %v908 = vpop.f32.mrf.mxu0
        %909 = vdwg.mxu0
        %v910 = vmax.f32 %v784, 0.0
        %v911 = vmax.f32 %v787, 0.0
        %v912 = vmax.f32 %v792, 0.0
        %v913 = vmax.f32 %v795, 0.0
        %v914 = vmax.f32 %v800, 0.0
        %v915 = vmax.f32 %v803, 0.0
        %v916 = vmax.f32 %v808, 0.0
        %v917 = vmax.f32 %v811, 0.0
        %v918 = vmax.f32 %v816, 0.0
        %v919 = vmax.f32 %v819, 0.0
        %v920 = vmax.f32 %v824, 0.0
        %v921 = vmax.f32 %v827, 0.0
        %v922 = vmax.f32 %v832, 0.0
        %v923 = vmax.f32 %v835, 0.0
        %v924 = vmax.f32 %v840, 0.0
        %v925 = vmax.f32 %v843, 0.0
        %v926 = vmax.f32 %v848, 0.0
        %v927 = vmax.f32 %v851, 0.0
        %v928 = vmax.f32 %v856, 0.0
        %v929 = vmax.f32 %v859, 0.0
        %v930 = vmax.f32 %v864, 0.0
        %v931 = vmax.f32 %v867, 0.0
        %v932 = vmax.f32 %v872, 0.0
        %v933 = vmax.f32 %v875, 0.0
        %v934 = vmax.f32 %v880, 0.0
        %v935 = vmax.f32 %v883, 0.0
        %v936 = vmax.f32 %v888, 0.0
        %v937 = vmax.f32 %v891, 0.0
        %v938 = vmax.f32 %v896, 0.0
        %v939 = vmax.f32 %v899, 0.0
        %v940 = vmax.f32 %v904, 0.0
        %v941 = vmax.f32 %v907, 0.0
        %v942 = vpack.c.bf16 %v911, %v910
        %v943 = vpack.c.bf16 %v913, %v912
        %v944 = vpack.c.bf16 %v915, %v914
        %v945 = vpack.c.bf16 %v917, %v916
        %v946 = vpack.c.bf16 %v919, %v918
        %v947 = vpack.c.bf16 %v921, %v920
        %v948 = vpack.c.bf16 %v923, %v922
        %v949 = vpack.c.bf16 %v925, %v924
        %v950 = vpack.c.bf16 %v927, %v926
        %v951 = vpack.c.bf16 %v929, %v928
        %v952 = vpack.c.bf16 %v931, %v930
        %v953 = vpack.c.bf16 %v933, %v932
        %v954 = vpack.c.bf16 %v935, %v934
        %v955 = vpack.c.bf16 %v937, %v936
        %v956 = vpack.c.bf16 %v939, %v938
        %v957 = vpack.c.bf16 %v941, %v940
        %v958 = vld [vmem:[%s5] sm:$0xf]
        %v959 = vld [vmem:[%s5 + $0x4] sm:$0xf]
        %v960 = vld [vmem:[%s5 + $0x8] sm:$0xf]
        %v961 = vld [vmem:[%s5 + $0xc] sm:$0xf]
        %v962 = vld [vmem:[%s6] sm:$0x1]
        %v964 = vlaneseq
        %v965 = vshrl.u32 %v964, 7
        %v966 = vsub.s32 0, %v965
        %v967 = vrot.slane %v962, %v966
        %v973 = vunpack.c.l.b16 %v958
        %v974 = vunpack.c.l.b16 %v959
        %v975 = vunpack.c.l.b16 %v960
        %v976 = vunpack.c.l.b16 %v961
        %v977 = vpack.c.b16 %v974, %v973
        %v978 = vpack.c.b16 %v976, %v975
        %v982 = vsel %vm700, %v942, 0
        %v985 = vsel %vm700, %v943, 0
        %v988 = vsel %vm700, %v944, 0
        %v991 = vsel %vm700, %v945, 0
        %v994 = vsel %vm700, %v946, 0
        %v997 = vsel %vm700, %v947, 0
        %v1000 = vsel %vm700, %v948, 0
        %v1003 = vsel %vm700, %v949, 0
        %v1006 = vsel %vm700, %v950, 0
        %v1009 = vsel %vm700, %v951, 0
        %v1012 = vsel %vm700, %v952, 0
        %v1015 = vsel %vm700, %v953, 0
        %v1018 = vsel %vm700, %v954, 0
        %v1021 = vsel %vm700, %v955, 0
        %v1024 = vsel %vm700, %v956, 0
        %v1027 = vsel %vm700, %v957, 0
        %1029 = vmatprep.subr.bf16.mxu0 0
        %1030 = vmatpush1.bf16.msra.mxu0 0
        %1031 = vmatprep.subr.bf16.mxu0 0
        %1032 = vmatpush1.bf16.msra.mxu0 0
        %1033 = vmatprep.subr.bf16.mxu0 0
        %1034 = vmatpush1.bf16.msra.mxu0 0
        %1035 = vmatprep.subr.bf16.mxu0 0
        %1036 = vmatpush1.bf16.msra.mxu0 0
        %1037 = vmatprep.subr.bf16.mxu0 0
        %1038 = vmatpush1.bf16.msra.mxu0 0
        %1039 = vmatprep.subr.bf16.mxu0 0
        %1040 = vmatpush1.bf16.msra.mxu0 0
        %1041 = vmatprep.subr.bf16.mxu0 0
        %1042 = vmatpush1.bf16.msra.mxu0 %v978
        %1043 = vmatprep.subr.bf16.mxu0 0
        %1044 = vmatpush1.bf16.msra.mxu0 %v977
        %1045 = vmatprep.subr.bf16.mxu0 0
        %1046 = vmatpush2.bf16.msra.mxu0 0
        %1047 = vmatprep.subr.bf16.mxu0 0
        %1048 = vmatpush2.bf16.msra.mxu0 0
        %1049 = vmatprep.subr.bf16.mxu0 0
        %1050 = vmatpush2.bf16.msra.mxu0 0
        %1051 = vmatprep.subr.bf16.mxu0 0
        %1052 = vmatpush2.bf16.msra.mxu0 0
        %1053 = vmatprep.subr.bf16.mxu0 0
        %1054 = vmatpush2.bf16.msra.mxu0 0
        %1055 = vmatprep.subr.bf16.mxu0 0
        %1056 = vmatpush2.bf16.msra.mxu0 0
        %1057 = vmatprep.subr.bf16.mxu0 0
        %1058 = vmatpush2.bf16.msra.mxu0 0
        %1059 = vmatprep.subr.bf16.mxu0 0
        %1060 = vmatpush2.bf16.msra.mxu0 0
        %1061 = vmatprep.mubr.bf16.mxu0 0
        %1062 = vmatmul.mubr.bf16.gmra.mxu0 %v982
        %v1063 = vpop.f32.mrf.mxu0
        %v1064 = vadd.f32 %v967, %v1063
        %v1065 = vpop.f32.mrf.mxu0
        %v1066 = vpop.f32.mrf.mxu0
        %v1067 = vadd.f32 %v967, %v1066
        %v1068 = vpop.f32.mrf.mxu0
        %1069 = vmatprep.mubr.bf16.mxu0 0
        %1070 = vmatmul.mubr.bf16.gmra.mxu0 %v985
        %v1071 = vpop.f32.mrf.mxu0
        %v1072 = vadd.f32 %v967, %v1071
        %v1073 = vpop.f32.mrf.mxu0
        %v1074 = vpop.f32.mrf.mxu0
        %v1075 = vadd.f32 %v967, %v1074
        %v1076 = vpop.f32.mrf.mxu0
        %1077 = vmatprep.mubr.bf16.mxu0 0
        %1078 = vmatmul.mubr.bf16.gmra.mxu0 %v988
        %v1079 = vpop.f32.mrf.mxu0
        %v1080 = vadd.f32 %v967, %v1079
        %v1081 = vpop.f32.mrf.mxu0
        %v1082 = vpop.f32.mrf.mxu0
        %v1083 = vadd.f32 %v967, %v1082
        %v1084 = vpop.f32.mrf.mxu0
        %1085 = vmatprep.mubr.bf16.mxu0 0
        %1086 = vmatmul.mubr.bf16.gmra.mxu0 %v991
        %v1087 = vpop.f32.mrf.mxu0
        %v1088 = vadd.f32 %v967, %v1087
        %v1089 = vpop.f32.mrf.mxu0
        %v1090 = vpop.f32.mrf.mxu0
        %v1091 = vadd.f32 %v967, %v1090
        %v1092 = vpop.f32.mrf.mxu0
        %1093 = vmatprep.mubr.bf16.mxu0 0
        %1094 = vmatmul.mubr.bf16.gmra.mxu0 %v994
        %v1095 = vpop.f32.mrf.mxu0
        %v1096 = vadd.f32 %v967, %v1095
        %v1097 = vpop.f32.mrf.mxu0
        %v1098 = vpop.f32.mrf.mxu0
        %v1099 = vadd.f32 %v967, %v1098
        %v1100 = vpop.f32.mrf.mxu0
        %1101 = vmatprep.mubr.bf16.mxu0 0
        %1102 = vmatmul.mubr.bf16.gmra.mxu0 %v997
        %v1103 = vpop.f32.mrf.mxu0
        %v1104 = vadd.f32 %v967, %v1103
        %v1105 = vpop.f32.mrf.mxu0
        %v1106 = vpop.f32.mrf.mxu0
        %v1107 = vadd.f32 %v967, %v1106
        %v1108 = vpop.f32.mrf.mxu0
        %1109 = vmatprep.mubr.bf16.mxu0 0
        %1110 = vmatmul.mubr.bf16.gmra.mxu0 %v1000
        %v1111 = vpop.f32.mrf.mxu0
        %v1112 = vadd.f32 %v967, %v1111
        %v1113 = vpop.f32.mrf.mxu0
        %v1114 = vpop.f32.mrf.mxu0
        %v1115 = vadd.f32 %v967, %v1114
        %v1116 = vpop.f32.mrf.mxu0
        %1117 = vmatprep.mubr.bf16.mxu0 0
        %1118 = vmatmul.mubr.bf16.gmra.mxu0 %v1003
        %v1119 = vpop.f32.mrf.mxu0
        %v1120 = vadd.f32 %v967, %v1119
        %v1121 = vpop.f32.mrf.mxu0
        %v1122 = vpop.f32.mrf.mxu0
        %v1123 = vadd.f32 %v967, %v1122
        %v1124 = vpop.f32.mrf.mxu0
        %1125 = vmatprep.mubr.bf16.mxu0 0
        %1126 = vmatmul.mubr.bf16.gmra.mxu0 %v1006
        %v1127 = vpop.f32.mrf.mxu0
        %v1128 = vadd.f32 %v967, %v1127
        %v1129 = vpop.f32.mrf.mxu0
        %v1130 = vpop.f32.mrf.mxu0
        %v1131 = vadd.f32 %v967, %v1130
        %v1132 = vpop.f32.mrf.mxu0
        %1133 = vmatprep.mubr.bf16.mxu0 0
        %1134 = vmatmul.mubr.bf16.gmra.mxu0 %v1009
        %v1135 = vpop.f32.mrf.mxu0
        %v1136 = vadd.f32 %v967, %v1135
        %v1137 = vpop.f32.mrf.mxu0
        %v1138 = vpop.f32.mrf.mxu0
        %v1139 = vadd.f32 %v967, %v1138
        %v1140 = vpop.f32.mrf.mxu0
        %1141 = vmatprep.mubr.bf16.mxu0 0
        %1142 = vmatmul.mubr.bf16.gmra.mxu0 %v1012
        %v1143 = vpop.f32.mrf.mxu0
        %v1144 = vadd.f32 %v967, %v1143
        %v1145 = vpop.f32.mrf.mxu0
        %v1146 = vpop.f32.mrf.mxu0
        %v1147 = vadd.f32 %v967, %v1146
        %v1148 = vpop.f32.mrf.mxu0
        %1149 = vmatprep.mubr.bf16.mxu0 0
        %1150 = vmatmul.mubr.bf16.gmra.mxu0 %v1015
        %v1151 = vpop.f32.mrf.mxu0
        %v1152 = vadd.f32 %v967, %v1151
        %v1153 = vpop.f32.mrf.mxu0
        %v1154 = vpop.f32.mrf.mxu0
        %v1155 = vadd.f32 %v967, %v1154
        %v1156 = vpop.f32.mrf.mxu0
        %1157 = vmatprep.mubr.bf16.mxu0 0
        %1158 = vmatmul.mubr.bf16.gmra.mxu0 %v1018
        %v1159 = vpop.f32.mrf.mxu0
        %v1160 = vadd.f32 %v967, %v1159
        %v1161 = vpop.f32.mrf.mxu0
        %v1162 = vpop.f32.mrf.mxu0
        %v1163 = vadd.f32 %v967, %v1162
        %v1164 = vpop.f32.mrf.mxu0
        %1165 = vmatprep.mubr.bf16.mxu0 0
        %1166 = vmatmul.mubr.bf16.gmra.mxu0 %v1021
        %v1167 = vpop.f32.mrf.mxu0
        %v1168 = vadd.f32 %v967, %v1167
        %v1169 = vpop.f32.mrf.mxu0
        %v1170 = vpop.f32.mrf.mxu0
        %v1171 = vadd.f32 %v967, %v1170
        %v1172 = vpop.f32.mrf.mxu0
        %1173 = vmatprep.mubr.bf16.mxu0 0
        %1174 = vmatmul.mubr.bf16.gmra.mxu0 %v1024
        %v1175 = vpop.f32.mrf.mxu0
        %v1176 = vadd.f32 %v967, %v1175
        %v1177 = vpop.f32.mrf.mxu0
        %v1178 = vpop.f32.mrf.mxu0
        %v1179 = vadd.f32 %v967, %v1178
        %v1180 = vpop.f32.mrf.mxu0
        %1181 = vmatprep.mubr.bf16.mxu0 0
        %1182 = vmatmul.mubr.bf16.gmra.mxu0 %v1027
        %v1183 = vpop.f32.mrf.mxu0
        %v1184 = vadd.f32 %v967, %v1183
        %v1185 = vpop.f32.mrf.mxu0
        %v1186 = vpop.f32.mrf.mxu0
        %v1187 = vadd.f32 %v967, %v1186
        %v1188 = vpop.f32.mrf.mxu0
        %1189 = vdwg.mxu0
        %v1190 = vmax.f32 %v1064, 0.0
        %v1191 = vmax.f32 %v1067, 0.0
        %v1192 = vmax.f32 %v1072, 0.0
        %v1193 = vmax.f32 %v1075, 0.0
        %v1194 = vmax.f32 %v1080, 0.0
        %v1195 = vmax.f32 %v1083, 0.0
        %v1196 = vmax.f32 %v1088, 0.0
        %v1197 = vmax.f32 %v1091, 0.0
        %v1198 = vmax.f32 %v1096, 0.0
        %v1199 = vmax.f32 %v1099, 0.0
        %v1200 = vmax.f32 %v1104, 0.0
        %v1201 = vmax.f32 %v1107, 0.0
        %v1202 = vmax.f32 %v1112, 0.0
        %v1203 = vmax.f32 %v1115, 0.0
        %v1204 = vmax.f32 %v1120, 0.0
        %v1205 = vmax.f32 %v1123, 0.0
        %v1206 = vmax.f32 %v1128, 0.0
        %v1207 = vmax.f32 %v1131, 0.0
        %v1208 = vmax.f32 %v1136, 0.0
        %v1209 = vmax.f32 %v1139, 0.0
        %v1210 = vmax.f32 %v1144, 0.0
        %v1211 = vmax.f32 %v1147, 0.0
        %v1212 = vmax.f32 %v1152, 0.0
        %v1213 = vmax.f32 %v1155, 0.0
        %v1214 = vmax.f32 %v1160, 0.0
        %v1215 = vmax.f32 %v1163, 0.0
        %v1216 = vmax.f32 %v1168, 0.0
        %v1217 = vmax.f32 %v1171, 0.0
        %v1218 = vmax.f32 %v1176, 0.0
        %v1219 = vmax.f32 %v1179, 0.0
        %v1220 = vmax.f32 %v1184, 0.0
        %v1221 = vmax.f32 %v1187, 0.0
        %v1222 = vpack.c.bf16 %v1191, %v1190
        %v1223 = vpack.c.bf16 %v1193, %v1192
        %v1224 = vpack.c.bf16 %v1195, %v1194
        %v1225 = vpack.c.bf16 %v1197, %v1196
        %v1226 = vpack.c.bf16 %v1199, %v1198
        %v1227 = vpack.c.bf16 %v1201, %v1200
        %v1228 = vpack.c.bf16 %v1203, %v1202
        %v1229 = vpack.c.bf16 %v1205, %v1204
        %v1230 = vpack.c.bf16 %v1207, %v1206
        %v1231 = vpack.c.bf16 %v1209, %v1208
        %v1232 = vpack.c.bf16 %v1211, %v1210
        %v1233 = vpack.c.bf16 %v1213, %v1212
        %v1234 = vpack.c.bf16 %v1215, %v1214
        %v1235 = vpack.c.bf16 %v1217, %v1216
        %v1236 = vpack.c.bf16 %v1219, %v1218
        %v1237 = vpack.c.bf16 %v1221, %v1220
        %v1238 = vld [vmem:[%s7] sm:$0x1]
        %s1239 = sld [smem:[#allocation2]]
        %v1240 = vstv %s1239
        %v1242 = vsel %vm700, %v1238, 0
        %v1245 = vsel %vm700, %v1222, 0
        %v1248 = vsel %vm700, %v1223, 0
        %v1251 = vsel %vm700, %v1224, 0
        %v1254 = vsel %vm700, %v1225, 0
        %v1257 = vsel %vm700, %v1226, 0
        %v1260 = vsel %vm700, %v1227, 0
        %v1263 = vsel %vm700, %v1228, 0
        %v1266 = vsel %vm700, %v1229, 0
        %v1269 = vsel %vm700, %v1230, 0
        %v1272 = vsel %vm700, %v1231, 0
        %v1275 = vsel %vm700, %v1232, 0
        %v1278 = vsel %vm700, %v1233, 0
        %v1281 = vsel %vm700, %v1234, 0
        %v1284 = vsel %vm700, %v1235, 0
        %v1287 = vsel %vm700, %v1236, 0
        %v1290 = vsel %vm700, %v1237, 0
        %1292 = vmatprep.subr.bf16.mxu0 0
        %1293 = vmatpush1.bf16.xpose.msra.mxu0 %v1266
        %1294 = vmatprep.subr.bf16.mxu0 0
        %1295 = vmatpush1.bf16.xpose.msra.mxu0 %v1263
        %1296 = vmatprep.subr.bf16.mxu0 0
        %1297 = vmatpush1.bf16.xpose.msra.mxu0 %v1260
        %1298 = vmatprep.subr.bf16.mxu0 0
        %1299 = vmatpush1.bf16.xpose.msra.mxu0 %v1257
        %1300 = vmatprep.subr.bf16.mxu0 0
        %1301 = vmatpush1.bf16.xpose.msra.mxu0 %v1254
        %1302 = vmatprep.subr.bf16.mxu0 0
        %1303 = vmatpush1.bf16.xpose.msra.mxu0 %v1251
        %1304 = vmatprep.subr.bf16.mxu0 0
        %1305 = vmatpush1.bf16.xpose.msra.mxu0 %v1248
        %1306 = vmatprep.subr.bf16.mxu0 0
        %1307 = vmatpush1.bf16.xpose.msra.mxu0 %v1245
        %1308 = vmatprep.subr.bf16.mxu0 0
        %1309 = vmatpush2.bf16.xpose.msra.mxu0 %v1290
        %1310 = vmatprep.subr.bf16.mxu0 0
        %1311 = vmatpush2.bf16.xpose.msra.mxu0 %v1287
        %1312 = vmatprep.subr.bf16.mxu0 0
        %1313 = vmatpush2.bf16.xpose.msra.mxu0 %v1284
        %1314 = vmatprep.subr.bf16.mxu0 0
        %1315 = vmatpush2.bf16.xpose.msra.mxu0 %v1281
        %1316 = vmatprep.subr.bf16.mxu0 0
        %1317 = vmatpush2.bf16.xpose.msra.mxu0 %v1278
        %1318 = vmatprep.subr.bf16.mxu0 0
        %1319 = vmatpush2.bf16.xpose.msra.mxu0 %v1275
        %1320 = vmatprep.subr.bf16.mxu0 0
        %1321 = vmatpush2.bf16.xpose.msra.mxu0 %v1272
        %1322 = vmatprep.subr.bf16.mxu0 0
        %1323 = vmatpush2.bf16.xpose.msra.mxu0 %v1269
        %1324 = vmatprep.mubr.bf16.mxu0 0
        %1325 = vmatmul.mubr.bf16.gmra.mxu0 %v1242
        %v1326 = vpop.f32.mrf.mxu0
        %v1327 = vadd.f32 %v1240, %v1326
        %v1328 = vpop.f32.mrf.mxu0
        %v1329 = vadd.f32 %v1240, %v1328
        %v1330 = vpop.f32.mrf.mxu0
        %v1331 = vpop.f32.mrf.mxu0
        %1332 = vdwg.mxu0
        %v1335 = vcombine.low %v1327, %v1329
        %v1337 = vunpack.c.l.s4 1966171168
        %v1338 = vunpack.c.0.s8 %v1337
        %v1339 = vlaneseq
        %v1340 = vshrl.u32 %v1339, 7
        %v1341 = vsub.s32 %v1338, %v1340
        %v1342 = vrot.slane %v1335, %v1341
        %v1344 = vunpack.c.l.s4 1966171168
        %v1345 = vunpack.c.0.s8 %v1344
        %v1346 = vlaneseq
        %v1347 = vshrl.u32 %v1346, 7
        %v1348 = vsub.s32 %v1345, %v1347
        %v1349 = vrot.slane %v1342, %v1348
        %v1351 = vlaneseq
        %vm1352 = vcmp.ge.s32.totalorder %v1351, 0
        %vm1353 = vcmp.lt.s32.totalorder %v1351, 256
        %vm1354 = vmand %vm1352, %vm1353
        %1355 = vst.msk [vmem:[%s339] sm:$0x3] %vm1354, %v1349
        %s1356 = sand.u32 %s226, 1
        %s1357 = scalar_lea.sflag [#allocation4], %s1356
        %s1358 = sand.u32 %s226, 1
        %s1359 = smul.addr %s1358, 2
        %s1360 = scalar_lea.vmem [#allocation3], %s1359
        // Predicated region
        $region57: #{tpu_custom_call.1} parent=55 // pred_check
          %p1361 = pneg %p236
        $region58: #{tpu_custom_call.1} parent=55 // pred_check_branch
          %1363 = sbr.rel (%p1361) target = $region60
        $region59: #{tpu_custom_call.1} parent=55 // pred_region
          %s1364 = smul.u32 2, %s24
          %s1366 = ssub.s32 32, 32
          %1367 = vsyncadd %s1357, %s1366
          %s1368 = smul.addr %s1364, 16
          %s1369 = scalar_lea.hbm %s9, %s1368
          %s1371 = sshll.u32 %s1360, 4
          %s1372 = int_to_ptr.vmem [resolvable:$true] %s1371
          %1374 = dma.vmem_to_hbm [thread:$0]  %s1372, 32, %s1369, %s1357
        $region60: #{tpu_custom_call.1} parent=55 // pred_fallthru
          _
      $region56: #{tpu_custom_call.1} parent=5 // pred_fallthru
        _
      %p1375 = scmp.le.s32.totalorder 2, %s19
      // Predicated region
      $region61: #{tpu_custom_call.1} parent=5 // pred_check
        %p1376 = pneg %p1375
      $region62: #{tpu_custom_call.1} parent=5 // pred_check_branch
        %1378 = sbr.rel (%p1376) target = $region64
      $region63: #{tpu_custom_call.1} parent=5 // pred_region
        %s1379 = ssub.s32 %s19, 2
        // Predicated region
        $region65: #{tpu_custom_call.1} parent=63 // pred_check
          %p1380 = pneg %p242
        $region66: #{tpu_custom_call.1} parent=63 // pred_check_branch
          %1382 = sbr.rel (%p1380) target = $region68
        $region67: #{tpu_custom_call.1} parent=63 // pred_region
          %s1383 = sand.u32 %s227, 1
          %s1384 = scalar_lea.sflag [#allocation4], %s1383
          %s1385 = sand.u32 %s227, 1
          %s1386 = smul.addr %s1385, 2
          %s1387 = scalar_lea.vmem [#allocation3], %s1386
          %1388 = dma.done %s1384, 32
        $region68: #{tpu_custom_call.1} parent=63 // pred_fallthru
          _
      $region64: #{tpu_custom_call.1} parent=5 // pred_fallthru
        _
    $region6: #{tpu_custom_call.1} parent=1 // loop_footer
      %s23 = sadd.s32 1, %s19
    $region7: #{tpu_custom_call.1} parent=1 // loop_footer_branch
      %18 = sbr.rel target = $region3
    $region8: #{tpu_custom_call.1} parent=1 // loop_exit
      _
    %1389 = vsyncpa [#allocation4], 1
    %s1390 = scalar_lea.sflag [#allocation4], 1
    %1391 = vsyncpa %s1390, 1

</llo_original>
